<compile_context>
chip_gen: v6e
topology: v6e:2x2x1
jax: 0.10.0
libtpu: 0.0.40
codegen_flags: <defaults>
</compile_context>

<pallas_src>
import jax
import jax.numpy as jnp
from jax.experimental import pallas as pl
from jax.experimental.pallas import tpu as pltpu

LANES = 128          # lane width of a vreg
SUBLANES = 8         # sublane height of a vreg (f32)
MAX_TILE_ROWS = 4096 # sublane-rows per grid step (4096*128 = 512Ki lane elements, 2 MiB)


def _pair_log_softmax_kernel(z_ref, o_ref):
    """z_ref / o_ref: VMEM f32[tile_r, 128].

    Lanes hold the flattened logits of [..., 2]: even lane = class-0 logit,
    odd lane = class-1 logit of the same (b, t) position.  For every lane i,
        log_softmax[i] = z[i] - logsumexp(z[i], z[i^1]) = -softplus(z[i^1] - z[i]),
    so the output keeps exactly the input's (natural, interleaved) layout.
    """
    z = z_ref[...]
    nl = z.shape[1]  # 128 (even, so class pairs never straddle a row)

    # Partner logit z[i ^ 1]: even lanes take the right neighbour (i+1),
    # odd lanes take the left neighbour (i-1).  Rolls run on the XLU slot.
    right = pltpu.roll(z, shift=1, axis=1)        # right[i] = z[i - 1]
    left = pltpu.roll(z, shift=nl - 1, axis=1)    # left[i]  = z[(i + 1) % nl]
    lane = jax.lax.broadcasted_iota(jnp.int32, z.shape, 1)
    partner = jnp.where((lane & 1) == 0, left, right)

    # Numerically stable softplus(t) = max(t, 0) + log(1 + exp(-|t|)).
    t = partner - z
    sp = jnp.maximum(t, 0.0) + jnp.log(1.0 + jnp.exp(-jnp.abs(t)))
    o_ref[...] = -sp


@jax.jit
def train_exception_model_forward(x, weight, bias):
    """x: [B, T, d_in] float; weight: [2, d_in]; bias: [2].

    Returns log_softmax(x @ weight.T + bias, axis=-1): [B, T, 2] float32.
    """
    B, T, d_in = x.shape
    d_out = weight.shape[0]
    assert d_out == 2, "kernel specialises the module's Linear(9, 2) head"
    n = B * T

    # Tiny linear layer as a plain XLA matvec in natural [n, d_in] layout:
    # streams x once (36 B/row) and writes the 2 logits (8 B/row).  No host-side
    # transpose / re-pack of x (review item 1, option (b)).
    xf = x.reshape(n, d_in).astype(jnp.float32)
    w = weight.astype(jnp.float32)
    b = bias.astype(jnp.float32)
    logits = jnp.dot(xf, w.T, preferred_element_type=jnp.float32) + b   # [n, 2]

    # Flatten to the natural interleaved order (free reshape): even index =
    # class-0 logit, odd index = class-1 logit of the same row.
    flat = logits.reshape(-1)                                           # [2n]
    total = flat.shape[0]                                               # even
    r = pl.cdiv(total, LANES)
    tile_r = min(MAX_TILE_ROWS, pl.cdiv(r, SUBLANES) * SUBLANES)
    r_pad = pl.cdiv(r, tile_r) * tile_r
    total_pad = r_pad * LANES
    if total_pad != total:
        # Pad with zeros (pad starts at an even index, so no class pair is
        # split); padded pairs produce -log(2) and are sliced off below.
        # No-op (and no copy) whenever 2*B*T is already a multiple of 128*tile_r.
        flat = jnp.pad(flat, (0, total_pad - total))
    packed = flat.reshape(r_pad, LANES)

    out2d = pl.pallas_call(
        _pair_log_softmax_kernel,
        out_shape=jax.ShapeDtypeStruct((r_pad, LANES), jnp.float32),
        grid=(r_pad // tile_r,),
        in_specs=[pl.BlockSpec((tile_r, LANES), lambda i: (i, 0))],
        out_specs=pl.BlockSpec((tile_r, LANES), lambda i: (i, 0)),
        compiler_params=pltpu.CompilerParams(
            dimension_semantics=("parallel",),   # megacore (v7x) shards the row axis
            vmem_limit_bytes=48 * 1024 * 1024,   # 2 MiB blocks x2 bufs x(in+out) + temps
        ),
        cost_estimate=pl.CostEstimate(
            flops=8 * total_pad,                 # VPU: sub/abs/max/add/select...
            transcendentals=2 * total_pad,       # exp + log per element (EUP)
            bytes_accessed=2 * total_pad * 4,    # read + write, f32
        ),
    )(packed)

    # Output is already in natural interleaved order: the reshape back to
    # [B, T, 2] is pure metadata (the slice is a no-op when no padding was added).
    out = out2d.reshape(-1)[:total].reshape(B, T, d_out)
    return out


if __name__ == "__main__":
    # Small shapes consistent with the module: Linear(9, 2) on [B, T, 9].
    B, T, D_IN, D_OUT = 2, 8, 9, 2

    key = jax.random.PRNGKey(0)
    kx, kw, kb = jax.random.split(key, 3)

    x = jax.random.normal(kx, (B, T, D_IN), dtype=jnp.float32)
    # torch Linear shapes: weight [out, in], bias [out].
    weight = jax.random.normal(kw, (D_OUT, D_IN), dtype=jnp.float32) * 0.1
    bias = jax.random.normal(kb, (D_OUT,), dtype=jnp.float32) * 0.1

    out = train_exception_model_forward(x, weight, bias)
    out = jax.block_until_ready(out)

    # Sanity check against a pure-JAX reference.
    ref = jax.nn.log_softmax(
        jnp.einsum("btd,od->bto", x, weight) + bias, axis=-1
    )
    assert out.shape == (B, T, D_OUT)
    assert jnp.allclose(out, ref, atol=1e-5, rtol=1e-5)

    print("KERNEL_OK")
</pallas_src>

<mosaic_0001>
module attributes {stable_mosaic.version = 11 : i64} {
  func.func @_pair_log_softmax_kernel(%arg0: i32, %arg1: memref<8x128xf32, #tpu.memory_space<vmem>>, %arg2: memref<8x128xf32, #tpu.memory_space<vmem>>) attributes {dimension_semantics = [#tpu.dimension_semantics<parallel>], iteration_bounds = array<i64: 1>, scalar_prefetch = 0 : i64, scratch_operands = 0 : i64, tpu.core_type = #tpu.core_type<tc>, window_params = [{transform_indices = @transform_0, window_bounds = array<i64: 8, 128>}, {transform_indices = @transform_1, window_bounds = array<i64: 8, 128>}]} {
    %c0 = arith.constant 0 : index
    %c0_0 = arith.constant 0 : index
    %0 = vector.load %arg1[%c0, %c0_0] : memref<8x128xf32, #tpu.memory_space<vmem>>, vector<8x128xf32>
    %c1_i32 = arith.constant 1 : i32
    %1 = tpu.dynamic_rotate %0 by %c1_i32 dim 1 : vector<8x128xf32>, i32 -> vector<8x128xf32>
    %c127_i32 = arith.constant 127 : i32
    %2 = tpu.dynamic_rotate %0 by %c127_i32 dim 1 : vector<8x128xf32>, i32 -> vector<8x128xf32>
    %3 = tpu.iota {dimensions = array<i32: 1>} : vector<8x128xi32>
    %c1_i32_1 = arith.constant 1 : i32
    %4 = vector.broadcast %c1_i32_1 : i32 to vector<8x128xi32>
    %5 = arith.andi %3, %4 : vector<8x128xi32>
    %c0_i32 = arith.constant 0 : i32
    %6 = vector.broadcast %c0_i32 : i32 to vector<8x128xi32>
    %7 = arith.cmpi eq, %5, %6 : vector<8x128xi32>
    %8 = arith.select %7, %2, %1 : vector<8x128xi1>, vector<8x128xf32>
    %9 = arith.subf %8, %0 : vector<8x128xf32>
    %cst = arith.constant 0.000000e+00 : f32
    %10 = vector.broadcast %cst : f32 to vector<8x128xf32>
    %11 = arith.maximumf %9, %10 : vector<8x128xf32>
    %12 = math.absf %9 : vector<8x128xf32>
    %cst_2 = arith.constant 0.000000e+00 : f32
    %13 = vector.broadcast %cst_2 : f32 to vector<8x128xf32>
    %14 = arith.subf %13, %12 : vector<8x128xf32>
    %15 = math.exp %14 : vector<8x128xf32>
    %cst_3 = arith.constant 1.000000e+00 : f32
    %16 = vector.broadcast %cst_3 : f32 to vector<8x128xf32>
    %17 = arith.addf %16, %15 : vector<8x128xf32>
    %18 = math.log %17 : vector<8x128xf32>
    %19 = arith.addf %11, %18 : vector<8x128xf32>
    %cst_4 = arith.constant 0.000000e+00 : f32
    %20 = vector.broadcast %cst_4 : f32 to vector<8x128xf32>
    %21 = arith.subf %20, %19 : vector<8x128xf32>
    %c0_5 = arith.constant 0 : index
    %c0_6 = arith.constant 0 : index
    %22 = vector.load %arg2[%c0_5, %c0_6] : memref<8x128xf32, #tpu.memory_space<vmem>>, vector<8x128xf32>
    tpu.vector_store %arg2[%c0_5, %c0_6], %21 {strides = array<i32>} : memref<8x128xf32, #tpu.memory_space<vmem>>, vector<8x128xf32>,
    return
  }
  func.func @transform_0(%arg0: i32) -> (i32, i32) {
    %c0_i32 = arith.constant 0 : i32
    %c0_i32_0 = arith.constant 0 : i32
    return %arg0, %c0_i32 : i32, i32
  }
  func.func @transform_1(%arg0: i32) -> (i32, i32) {
    %c0_i32 = arith.constant 0 : i32
    %c0_i32_0 = arith.constant 0 : i32
    return %arg0, %c0_i32 : i32, i32
  }
}

</mosaic_0001>

<llo_original>
// kernel: train_exception_model_forward.1
$region0: #{train_exception_model_forward.1}
  #allocation0 [shape = 'u32[]', space=smem, size = 0x4, offset = 0x4, fixed_abs, tag = 'smem constant byte address 0x4 - core index']
  #allocation1 [shape = 'u32[144,128]{1,0:T(1,128)}', space=vmem, size = 0x12000, scoped, tag = 'internal scratch']
  %s0 = inlined_call_operand.vmem [shape: f32[8,128], index: 0, kind: input, shape index: {}]
  %s1 = inlined_call_operand.vmem [shape: f32[8,128], index: 1, kind: output, shape index: {}]
  %s2 = sld [smem:[#allocation0]]
  $region14: #{train_exception_model_forward.1} parent=0
    _
  %s4 = ssub.s32 1, %s2
  %s5 = scalar_select 0, %s4, %s2
  // Predicated region
  $region2: #{train_exception_model_forward.1} parent=0 // pred_check
    _
  $region3: #{train_exception_model_forward.1} parent=0 // pred_check_branch
    %7 = sbr.rel (0) target = $region5
  $region4: #{train_exception_model_forward.1} parent=0 // pred_region
    _
  $region5: #{train_exception_model_forward.1} parent=0 // pred_fallthru
    _
  %v8 = vld [vmem:[%s0] sm:$0xff]
  %9 = vrot.lane.b32.xlu0 %v8, 1
  %v10 = vpop.permute.xlu0 %9
  %11 = vrot.lane.b32.xlu0 %v8, 127
  %v12 = vpop.permute.xlu0 %11
  %v13 = vlaneseq
  %v14 = vand.u32 %v13, 127
  %v15 = vand.u32 %v14, 1
  %vm16 = vcmp.eq.s32.totalorder %v15, 0
  %v17 = vsel %vm16, %v12, %v10
  %v18 = vsub.f32 %v17, %v8
  %v19 = vmax.f32 %v18, 0.0
  %v20 = vand.u32 2147483647, %v18
  %v21 = vsub.f32 0.0, %v20
  %v22 = vmul.f32 %v21, 1.442695
  %v23 = vpow.pop %v22
  %v24 = vadd.f32 %v23, 1.0
  %v25 = vlog2.pop %v24
  %v26 = vmul.f32 %v25, 0.6931472
  %v27 = vadd.f32 %v19, %v26
  %v28 = vsub.f32 0.0, %v27
  %29 = vst [vmem:[%s1] sm:$0xff] %v28
  // Predicated region
  $region6: #{train_exception_model_forward.1} parent=0 // pred_check
    _
  $region7: #{train_exception_model_forward.1} parent=0 // pred_check_branch
    %31 = sbr.rel (0) target = $region9
  $region8: #{train_exception_model_forward.1} parent=0 // pred_region
    _
  $region9: #{train_exception_model_forward.1} parent=0 // pred_fallthru
    _
  // Predicated region
  $region10: #{train_exception_model_forward.1} parent=0 // pred_check
    _
  $region11: #{train_exception_model_forward.1} parent=0 // pred_check_branch
    %33 = sbr.rel (0) target = $region13
  $region12: #{train_exception_model_forward.1} parent=0 // pred_region
    _
  $region13: #{train_exception_model_forward.1} parent=0 // pred_fallthru
    _

</llo_original>
